<compile_context>
chip_gen: v5e
topology: v5e:2x2
jax: 0.10.0
libtpu: 0.0.40
codegen_flags: <defaults>
</compile_context>

<pallas_src>
import functools
import math

import jax
import jax.numpy as jnp
from jax.experimental import pallas as pl
from jax.experimental.pallas import tpu as pltpu


def _round_up(x, m):
    return ((x + m - 1) // m) * m


def _vmem_limit_bytes():
    """~75% of physical per-core VMEM: 96 MiB on v5e/v6e, 48 MiB on v7x."""
    cap = 64 * 1024 * 1024  # conservative (v7x-sized) fallback
    try:
        info = pltpu.get_tpu_info()
        cap = int(getattr(info, "vmem_capacity_bytes", cap))
    except Exception:
        pass
    return (cap * 3) // 4


def _pick_tile(dim_padded, preferred):
    """Largest multiple-of-256 divisor of dim_padded that is <= preferred.

    dim_padded is always a multiple of 256 (wrapper pads), so this never
    degenerates to tiny tiles or a full-dim VMEM-busting block.
    """
    t = min(preferred, dim_padded)
    t -= t % 256
    t = max(t, 256)
    while t > 256 and dim_padded % t != 0:
        t -= 256
    return t


def _pad2(a, rows, cols):
    pr = rows - a.shape[0]
    pc = cols - a.shape[1]
    if pr or pc:
        a = jnp.pad(a, ((0, pr), (0, pc)))
    return a


# ---------------------------------------------------------------------------
# Kernel 1: support = X @ W  (row-tiled; F_in / F_out kept whole per block).
# Emitted in bf16 so kernel 2 gets bf16 MXU operands and half the DMA bytes.
# ---------------------------------------------------------------------------
def _support_kernel(x_ref, w_ref, o_ref):
    o_ref[...] = jnp.dot(
        x_ref[...], w_ref[...], preferred_element_type=jnp.float32
    ).astype(o_ref.dtype)


def _compute_support(x_bf16, w_bf16, *, tm, vmem_limit):
    n, f_in = x_bf16.shape
    f_out = w_bf16.shape[1]
    cost = pl.CostEstimate(
        flops=2 * n * f_in * f_out,
        transcendentals=0,
        bytes_accessed=2 * n * f_in + 2 * f_in * f_out + 2 * n * f_out,
    )
    return pl.pallas_call(
        _support_kernel,
        out_shape=jax.ShapeDtypeStruct((n, f_out), jnp.bfloat16),
        grid_spec=pltpu.PrefetchScalarGridSpec(
            num_scalar_prefetch=0,
            grid=(n // tm,),
            in_specs=[
                pl.BlockSpec((tm, f_in), lambda i: (i, 0)),
                pl.BlockSpec((f_in, f_out), lambda i: (0, 0)),
            ],
            out_specs=pl.BlockSpec((tm, f_out), lambda i: (i, 0)),
        ),
        compiler_params=pltpu.CompilerParams(
            dimension_semantics=("parallel",),
            vmem_limit_bytes=vmem_limit,
        ),
        cost_estimate=cost,
    )(x_bf16, w_bf16)


# ---------------------------------------------------------------------------
# Kernel 2: output = adj @ support (+ bias), tiled over (row_tile, k_tile).
# Accumulates in f32 directly into the resident output block (init with the
# broadcast bias / zeros at k==0).  `support` is either fully VMEM-resident
# (tk_resident = tile size, slice per k) or streamed per-k (tk_resident=None).
# ---------------------------------------------------------------------------
def _aggregate_kernel(*refs, tk_resident, has_bias):
    if has_bias:
        adj_ref, s_ref, b_ref, o_ref = refs
    else:
        adj_ref, s_ref, o_ref = refs

    k = pl.program_id(1)

    @pl.when(k == 0)
    def _():
        if has_bias:
            o_ref[...] = jnp.broadcast_to(b_ref[...], o_ref.shape)
        else:
            o_ref[...] = jnp.zeros_like(o_ref)

    if tk_resident is None:
        s_blk = s_ref[...]                                   # streamed (tk, F)
    else:
        start = pl.multiple_of(k * tk_resident, tk_resident)  # resident slice
        s_blk = s_ref[pl.ds(start, tk_resident), :]

    o_ref[...] += jnp.dot(adj_ref[...], s_blk, preferred_element_type=jnp.float32)


def _aggregate(adj_bf16, support_bf16, bias_f32, *, tm, tk, vmem_limit):
    n = adj_bf16.shape[0]
    f_out = support_bf16.shape[1]
    has_bias = bias_f32 is not None

    # Resident-support decision (conservative: count double buffers everywhere).
    support_bytes = n * f_out * 2                                   # bf16
    fixed_bytes = (
        2 * tm * tk * 2                                             # adj tile x2
        + 2 * tm * f_out * 4                                        # out block x2
        + (2 * f_out * 4 if has_bias else 0)                        # bias x2
    )
    resident = (2 * support_bytes + fixed_bytes) <= max(vmem_limit - (8 << 20), 0)

    if resident:
        support_spec = pl.BlockSpec((n, f_out), lambda i, k: (0, 0))
        tk_resident = tk
        support_reads = 1
    else:
        support_spec = pl.BlockSpec((tk, f_out), lambda i, k: (k, 0))
        tk_resident = None
        support_reads = n // tm

    in_specs = [pl.BlockSpec((tm, tk), lambda i, k: (i, k)), support_spec]
    args = [adj_bf16, support_bf16]
    if has_bias:
        in_specs.append(pl.BlockSpec((1, f_out), lambda i, k: (0, 0)))
        args.append(bias_f32)

    cost = pl.CostEstimate(
        flops=2 * n * n * f_out,
        transcendentals=0,
        bytes_accessed=(
            2 * n * n                              # adj (bf16)
            + support_reads * 2 * n * f_out        # support (bf16)
            + 4 * n * f_out                        # output (f32)
            + (4 * f_out if has_bias else 0)
        ),
    )

    kernel = functools.partial(
        _aggregate_kernel, tk_resident=tk_resident, has_bias=has_bias)

    return pl.pallas_call(
        kernel,
        out_shape=jax.ShapeDtypeStruct((n, f_out), jnp.float32),
        grid_spec=pltpu.PrefetchScalarGridSpec(
            num_scalar_prefetch=0,
            grid=(n // tm, n // tk),
            in_specs=in_specs,
            out_specs=pl.BlockSpec((tm, f_out), lambda i, k: (i, 0)),
        ),
        compiler_params=pltpu.CompilerParams(
            dimension_semantics=("parallel", "arbitrary"),
            vmem_limit_bytes=vmem_limit,
        ),
        cost_estimate=cost,
    )(*args)


def gcn_forward(x, adj, weight, bias=None, *, row_tile=1024, k_tile=1024):
    """GraphConvolution forward.

    x:      (N, F_in)  float32 node features
    adj:    (N, N)     float32 (dense) normalized adjacency
    weight: (F_in, F_out)
    bias:   (F_out,) or None
    """
    n, f_in = x.shape
    f_out = weight.shape[1]
    assert adj.shape == (n, n)
    assert weight.shape[0] == f_in

    out_dtype = x.dtype
    vmem_limit = _vmem_limit_bytes()

    # Pad N to a multiple of 256 (MXU/sublane friendly on all generations) and
    # F_out to a multiple of 128 (lane-dense output stores). Zero-padded adj
    # rows/cols and x rows contribute nothing; the output is sliced back.
    n_pad = _round_up(n, 256)
    f_out_pad = _round_up(f_out, 128)

    tm = _pick_tile(n_pad, row_tile)
    tk = _pick_tile(n_pad, k_tile)

    # bf16 MXU operands; accumulation stays f32 inside the kernels.
    x_p = _pad2(x, n_pad, f_in).astype(jnp.bfloat16)
    adj_p = _pad2(adj, n_pad, n_pad).astype(jnp.bfloat16)
    w_p = _pad2(weight, f_in, f_out_pad).astype(jnp.bfloat16)
    bias_p = None
    if bias is not None:
        bias_p = jnp.pad(bias.astype(jnp.float32),
                         (0, f_out_pad - f_out)).reshape(1, f_out_pad)

    support = _compute_support(x_p, w_p, tm=tm, vmem_limit=vmem_limit)
    out = _aggregate(adj_p, support, bias_p, tm=tm, tk=tk, vmem_limit=vmem_limit)
    return out[:n, :f_out].astype(out_dtype)


if __name__ == "__main__":
    # Small, TPU-friendly shapes consistent with the module:
    #   N nodes = 128, in_features = 64, out_features = 128
    N, F_IN, F_OUT = 128, 64, 128

    key = jax.random.PRNGKey(0)
    kx, kadj, kw, kb = jax.random.split(key, 4)

    x = jax.random.normal(kx, (N, F_IN), dtype=jnp.float32)

    # Row-normalized dense "sparse" adjacency (spmm is mathematically a matmul).
    adj_raw = (jax.random.uniform(kadj, (N, N)) > 0.9).astype(jnp.float32)
    adj_raw = adj_raw + jnp.eye(N, dtype=jnp.float32)
    adj = adj_raw / jnp.sum(adj_raw, axis=1, keepdims=True)

    # Deterministic parameter init mirroring reset_parameters():
    #   uniform(-stdv, stdv), stdv = 1/sqrt(out_features)
    stdv = 1.0 / math.sqrt(F_OUT)
    weight = jax.random.uniform(kw, (F_IN, F_OUT), minval=-stdv, maxval=stdv,
                                dtype=jnp.float32)
    bias = jax.random.uniform(kb, (F_OUT,), minval=-stdv, maxval=stdv,
                              dtype=jnp.float32)

    # --- bias path -------------------------------------------------------
    out = gcn_forward(x, adj, weight, bias)
    out = jax.block_until_ready(out)

    ref = adj @ (x @ weight) + bias               # f32 reference
    assert out.shape == (N, F_OUT)
    # bf16 MXU operands with f32 accumulation -> slightly looser tolerance.
    assert jnp.allclose(out, ref, atol=5e-2, rtol=5e-2), (
        float(jnp.max(jnp.abs(out - ref))))

    # --- no-bias path (separate kernel variant, no bias DMA) --------------
    out_nb = gcn_forward(x, adj, weight, None)
    out_nb = jax.block_until_ready(out_nb)
    ref_nb = adj @ (x @ weight)
    assert jnp.allclose(out_nb, ref_nb, atol=5e-2, rtol=5e-2), (
        float(jnp.max(jnp.abs(out_nb - ref_nb))))

    print("KERNEL_OK")
</pallas_src>

<mosaic_0001>
module attributes {stable_mosaic.version = 11 : i64} {
  func.func @_support_kernel(%arg0: i32, %arg1: memref<256x64xbf16, #tpu.memory_space<vmem>>, %arg2: memref<64x128xbf16, #tpu.memory_space<vmem>>, %arg3: memref<256x128xbf16, #tpu.memory_space<vmem>>) attributes {dimension_semantics = [#tpu.dimension_semantics<parallel>], iteration_bounds = array<i64: 1>, scalar_prefetch = 0 : i64, scratch_operands = 0 : i64, tpu.core_type = #tpu.core_type<tc>, window_params = [{transform_indices = @transform_0, window_bounds = array<i64: 256, 64>}, {pipeline_mode = #tpu.pipeline_mode<synchronous>, transform_indices = @transform_1, window_bounds = array<i64: 64, 128>}, {transform_indices = @transform_2, window_bounds = array<i64: 256, 128>}]} {
    %c0 = arith.constant 0 : index
    %c0_0 = arith.constant 0 : index
    %0 = vector.load %arg1[%c0, %c0_0] : memref<256x64xbf16, #tpu.memory_space<vmem>>, vector<256x64xbf16>
    %c0_1 = arith.constant 0 : index
    %c0_2 = arith.constant 0 : index
    %1 = vector.load %arg2[%c0_1, %c0_2] : memref<64x128xbf16, #tpu.memory_space<vmem>>, vector<64x128xbf16>
    %cst = arith.constant dense<0.000000e+00> : vector<256x128xf32>
    %2 = tpu.matmul %0, %1, %cst {dimension_numbers = #tpu.dot_dimension_numbers<[1], [0], [0], [1], [0, 0, 1, 1], [], []>} : vector<256x64xbf16>, vector<64x128xbf16>, vector<256x128xf32> -> vector<256x128xf32>
    %3 = arith.truncf %2 : vector<256x128xf32> to vector<256x128xbf16>
    %c0_3 = arith.constant 0 : index
    %c0_4 = arith.constant 0 : index
    %4 = vector.load %arg3[%c0_3, %c0_4] : memref<256x128xbf16, #tpu.memory_space<vmem>>, vector<256x128xbf16>
    tpu.vector_store %arg3[%c0_3, %c0_4], %3 {strides = array<i32>} : memref<256x128xbf16, #tpu.memory_space<vmem>>, vector<256x128xbf16>,
    return
  }
  func.func @transform_0(%arg0: i32) -> (i32, i32) {
    %c0_i32 = arith.constant 0 : i32
    %c0_i32_0 = arith.constant 0 : i32
    return %arg0, %c0_i32 : i32, i32
  }
  func.func @transform_1(%arg0: i32) -> (i32, i32) {
    %c0_i32 = arith.constant 0 : i32
    %c0_i32_0 = arith.constant 0 : i32
    %c0_i32_1 = arith.constant 0 : i32
    return %c0_i32, %c0_i32_0 : i32, i32
  }
  func.func @transform_2(%arg0: i32) -> (i32, i32) {
    %c0_i32 = arith.constant 0 : i32
    %c0_i32_0 = arith.constant 0 : i32
    return %arg0, %c0_i32 : i32, i32
  }
}

</mosaic_0001>

<llo_original>
// kernel: tpu_custom_call.1
$region0: #{tpu_custom_call.1}
  #allocation0 [shape = 'u32[]', space=smem, size = 0x4, offset = 0x4, fixed_abs, tag = 'smem constant byte address 0x4 - core index']
  #allocation1 [shape = 'u32[72,128]{1,0:T(1,128)}', space=vmem, size = 0x9000, scoped, tag = 'internal scratch']
  %s0 = inlined_call_operand.vmem [shape: bf16[256,64], index: 0, kind: input, shape index: {}]
  %s1 = inlined_call_operand.vmem [shape: bf16[64,128], index: 1, kind: input, shape index: {}]
  %s2 = inlined_call_operand.hbm [shape: bf16[256,128], index: 2, kind: output, shape index: {}]
  %s3 = sld [smem:[#allocation0]]
  $region18: #{tpu_custom_call.1} parent=0
    _
  %s5 = ssub.s32 1, %s3
  %s6 = scalar_select 0, %s5, %s3
  $region1: #{tpu_custom_call.1} parent=0
    #allocation2 [shape = 'u8[65536]{0}', space=vmem, size = 0x10000, scoped, tag = 'output window, operand 0, single buffered']
    #allocation3 [shape = 's32[1]{0}', space=sflag, size = 0x4, scoped, tag = 'scoped memory for tpu_custom_call.1']
    %7 = vsyncpa [#allocation3], 0
    // Predicated region
    $region2: #{tpu_custom_call.1} parent=1 // pred_check
      _
    $region3: #{tpu_custom_call.1} parent=1 // pred_check_branch
      %9 = sbr.rel (0) target = $region5
    $region4: #{tpu_custom_call.1} parent=1 // pred_region
      _
    $region5: #{tpu_custom_call.1} parent=1 // pred_fallthru
      _
    // Predicated region
    $region6: #{tpu_custom_call.1} parent=1 // pred_check
      _
    $region7: #{tpu_custom_call.1} parent=1 // pred_check_branch
      %11 = sbr.rel (0) target = $region9
    $region8: #{tpu_custom_call.1} parent=1 // pred_region
      _
    $region9: #{tpu_custom_call.1} parent=1 // pred_fallthru
      _
    %v13 = vld [vmem:[%s0] sm:$0xf]
    %v14 = vld [vmem:[%s0 + $0x4] sm:$0xf]
    %v15 = vld [vmem:[%s0 + $0x8] sm:$0xf]
    %v16 = vld [vmem:[%s0 + $0xc] sm:$0xf]
    %v17 = vld [vmem:[%s0 + $0x10] sm:$0xf]
    %v18 = vld [vmem:[%s0 + $0x14] sm:$0xf]
    %v19 = vld [vmem:[%s0 + $0x18] sm:$0xf]
    %v20 = vld [vmem:[%s0 + $0x1c] sm:$0xf]
    %v21 = vld [vmem:[%s0 + $0x20] sm:$0xf]
    %v22 = vld [vmem:[%s0 + $0x24] sm:$0xf]
    %v23 = vld [vmem:[%s0 + $0x28] sm:$0xf]
    %v24 = vld [vmem:[%s0 + $0x2c] sm:$0xf]
    %v25 = vld [vmem:[%s0 + $0x30] sm:$0xf]
    %v26 = vld [vmem:[%s0 + $0x34] sm:$0xf]
    %v27 = vld [vmem:[%s0 + $0x38] sm:$0xf]
    %v28 = vld [vmem:[%s0 + $0x3c] sm:$0xf]
    %v29 = vld [vmem:[%s0 + $0x40] sm:$0xf]
    %v30 = vld [vmem:[%s0 + $0x44] sm:$0xf]
    %v31 = vld [vmem:[%s0 + $0x48] sm:$0xf]
    %v32 = vld [vmem:[%s0 + $0x4c] sm:$0xf]
    %v33 = vld [vmem:[%s0 + $0x50] sm:$0xf]
    %v34 = vld [vmem:[%s0 + $0x54] sm:$0xf]
    %v35 = vld [vmem:[%s0 + $0x58] sm:$0xf]
    %v36 = vld [vmem:[%s0 + $0x5c] sm:$0xf]
    %v37 = vld [vmem:[%s0 + $0x60] sm:$0xf]
    %v38 = vld [vmem:[%s0 + $0x64] sm:$0xf]
    %v39 = vld [vmem:[%s0 + $0x68] sm:$0xf]
    %v40 = vld [vmem:[%s0 + $0x6c] sm:$0xf]
    %v41 = vld [vmem:[%s0 + $0x70] sm:$0xf]
    %v42 = vld [vmem:[%s0 + $0x74] sm:$0xf]
    %v43 = vld [vmem:[%s0 + $0x78] sm:$0xf]
    %v44 = vld [vmem:[%s0 + $0x7c] sm:$0xf]
    %v45 = vld [vmem:[%s1] sm:$0xf]
    %v46 = vld [vmem:[%s1 + $0x4] sm:$0xf]
    %v47 = vld [vmem:[%s1 + $0x8] sm:$0xf]
    %v48 = vld [vmem:[%s1 + $0xc] sm:$0xf]
    %v49 = vld [vmem:[%s1 + $0x10] sm:$0xf]
    %v50 = vld [vmem:[%s1 + $0x14] sm:$0xf]
    %v51 = vld [vmem:[%s1 + $0x18] sm:$0xf]
    %v52 = vld [vmem:[%s1 + $0x1c] sm:$0xf]
    %v85 = vunpack.c.l.b16 %v13
    %v86 = vunpack.c.l.b16 %v14
    %v87 = vunpack.c.l.b16 %v15
    %v88 = vunpack.c.l.b16 %v16
    %v89 = vunpack.c.l.b16 %v17
    %v90 = vunpack.c.l.b16 %v18
    %v91 = vunpack.c.l.b16 %v19
    %v92 = vunpack.c.l.b16 %v20
    %v93 = vunpack.c.l.b16 %v21
    %v94 = vunpack.c.l.b16 %v22
    %v95 = vunpack.c.l.b16 %v23
    %v96 = vunpack.c.l.b16 %v24
    %v97 = vunpack.c.l.b16 %v25
    %v98 = vunpack.c.l.b16 %v26
    %v99 = vunpack.c.l.b16 %v27
    %v100 = vunpack.c.l.b16 %v28
    %v101 = vunpack.c.l.b16 %v29
    %v102 = vunpack.c.l.b16 %v30
    %v103 = vunpack.c.l.b16 %v31
    %v104 = vunpack.c.l.b16 %v32
    %v105 = vunpack.c.l.b16 %v33
    %v106 = vunpack.c.l.b16 %v34
    %v107 = vunpack.c.l.b16 %v35
    %v108 = vunpack.c.l.b16 %v36
    %v109 = vunpack.c.l.b16 %v37
    %v110 = vunpack.c.l.b16 %v38
    %v111 = vunpack.c.l.b16 %v39
    %v112 = vunpack.c.l.b16 %v40
    %v113 = vunpack.c.l.b16 %v41
    %v114 = vunpack.c.l.b16 %v42
    %v115 = vunpack.c.l.b16 %v43
    %v116 = vunpack.c.l.b16 %v44
    %v117 = vpack.c.b16 %v86, %v85
    %v118 = vpack.c.b16 %v88, %v87
    %v119 = vpack.c.b16 %v90, %v89
    %v120 = vpack.c.b16 %v92, %v91
    %v121 = vpack.c.b16 %v94, %v93
    %v122 = vpack.c.b16 %v96, %v95
    %v123 = vpack.c.b16 %v98, %v97
    %v124 = vpack.c.b16 %v100, %v99
    %v125 = vpack.c.b16 %v102, %v101
    %v126 = vpack.c.b16 %v104, %v103
    %v127 = vpack.c.b16 %v106, %v105
    %v128 = vpack.c.b16 %v108, %v107
    %v129 = vpack.c.b16 %v110, %v109
    %v130 = vpack.c.b16 %v112, %v111
    %v131 = vpack.c.b16 %v114, %v113
    %v132 = vpack.c.b16 %v116, %v115
    %v141 = vunpack.c.l.b16 %v45
    %v142 = vunpack.c.l.b16 %v46
    %v143 = vunpack.c.l.b16 %v47
    %v144 = vunpack.c.l.b16 %v48
    %v145 = vunpack.c.l.b16 %v49
    %v146 = vunpack.c.l.b16 %v50
    %v147 = vunpack.c.l.b16 %v51
    %v148 = vunpack.c.l.b16 %v52
    %v149 = vpack.c.b16 %v142, %v141
    %v150 = vpack.c.b16 %v144, %v143
    %v151 = vpack.c.b16 %v146, %v145
    %v152 = vpack.c.b16 %v148, %v147
    %vm157 = vcmask 523264
    %v159 = vsel %vm157, %v117, 0
    %v162 = vsel %vm157, %v118, 0
    %v165 = vsel %vm157, %v119, 0
    %v168 = vsel %vm157, %v120, 0
    %v171 = vsel %vm157, %v121, 0
    %v174 = vsel %vm157, %v122, 0
    %v177 = vsel %vm157, %v123, 0
    %v180 = vsel %vm157, %v124, 0
    %v183 = vsel %vm157, %v125, 0
    %v186 = vsel %vm157, %v126, 0
    %v189 = vsel %vm157, %v127, 0
    %v192 = vsel %vm157, %v128, 0
    %v195 = vsel %vm157, %v129, 0
    %v198 = vsel %vm157, %v130, 0
    %v201 = vsel %vm157, %v131, 0
    %v204 = vsel %vm157, %v132, 0
    %206 = vmatpush.bf16.msra.mxu0 0
    %207 = vmatpush.bf16.msra.mxu0 0
    %208 = vmatpush.bf16.msra.mxu0 0
    %209 = vmatpush.bf16.msra.mxu0 0
    %210 = vmatpush.bf16.msra.mxu0 %v152
    %211 = vmatpush.bf16.msra.mxu0 %v151
    %212 = vmatpush.bf16.msra.mxu0 %v150
    %213 = vmatpush.bf16.msra.mxu0 %v149
    %214 = vmatmul.bf16.gmra.mxu0 %v159
    %v215 = vpop.f32.mrf.mxu0
    %v216 = vadd.f32 0.0, %v215
    %v217 = vpop.f32.mrf.mxu0
    %v218 = vadd.f32 0.0, %v217
    %219 = vmatmul.bf16.gmra.mxu0 %v162
    %v220 = vpop.f32.mrf.mxu0
    %v221 = vadd.f32 0.0, %v220
    %v222 = vpop.f32.mrf.mxu0
    %v223 = vadd.f32 0.0, %v222
    %224 = vmatmul.bf16.gmra.mxu0 %v165
    %v225 = vpop.f32.mrf.mxu0
    %v226 = vadd.f32 0.0, %v225
    %v227 = vpop.f32.mrf.mxu0
    %v228 = vadd.f32 0.0, %v227
    %229 = vmatmul.bf16.gmra.mxu0 %v168
    %v230 = vpop.f32.mrf.mxu0
    %v231 = vadd.f32 0.0, %v230
    %v232 = vpop.f32.mrf.mxu0
    %v233 = vadd.f32 0.0, %v232
    %234 = vmatmul.bf16.gmra.mxu0 %v171
    %v235 = vpop.f32.mrf.mxu0
    %v236 = vadd.f32 0.0, %v235
    %v237 = vpop.f32.mrf.mxu0
    %v238 = vadd.f32 0.0, %v237
    %239 = vmatmul.bf16.gmra.mxu0 %v174
    %v240 = vpop.f32.mrf.mxu0
    %v241 = vadd.f32 0.0, %v240
    %v242 = vpop.f32.mrf.mxu0
    %v243 = vadd.f32 0.0, %v242
    %244 = vmatmul.bf16.gmra.mxu0 %v177
    %v245 = vpop.f32.mrf.mxu0
    %v246 = vadd.f32 0.0, %v245
    %v247 = vpop.f32.mrf.mxu0
    %v248 = vadd.f32 0.0, %v247
    %249 = vmatmul.bf16.gmra.mxu0 %v180
    %v250 = vpop.f32.mrf.mxu0
    %v251 = vadd.f32 0.0, %v250
    %v252 = vpop.f32.mrf.mxu0
    %v253 = vadd.f32 0.0, %v252
    %254 = vmatmul.bf16.gmra.mxu0 %v183
    %v255 = vpop.f32.mrf.mxu0
    %v256 = vadd.f32 0.0, %v255
    %v257 = vpop.f32.mrf.mxu0
    %v258 = vadd.f32 0.0, %v257
    %259 = vmatmul.bf16.gmra.mxu0 %v186
    %v260 = vpop.f32.mrf.mxu0
    %v261 = vadd.f32 0.0, %v260
    %v262 = vpop.f32.mrf.mxu0
    %v263 = vadd.f32 0.0, %v262
    %264 = vmatmul.bf16.gmra.mxu0 %v189
    %v265 = vpop.f32.mrf.mxu0
    %v266 = vadd.f32 0.0, %v265
    %v267 = vpop.f32.mrf.mxu0
    %v268 = vadd.f32 0.0, %v267
    %269 = vmatmul.bf16.gmra.mxu0 %v192
    %v270 = vpop.f32.mrf.mxu0
    %v271 = vadd.f32 0.0, %v270
    %v272 = vpop.f32.mrf.mxu0
    %v273 = vadd.f32 0.0, %v272
    %274 = vmatmul.bf16.gmra.mxu0 %v195
    %v275 = vpop.f32.mrf.mxu0
    %v276 = vadd.f32 0.0, %v275
    %v277 = vpop.f32.mrf.mxu0
    %v278 = vadd.f32 0.0, %v277
    %279 = vmatmul.bf16.gmra.mxu0 %v198
    %v280 = vpop.f32.mrf.mxu0
    %v281 = vadd.f32 0.0, %v280
    %v282 = vpop.f32.mrf.mxu0
    %v283 = vadd.f32 0.0, %v282
    %284 = vmatmul.bf16.gmra.mxu0 %v201
    %v285 = vpop.f32.mrf.mxu0
    %v286 = vadd.f32 0.0, %v285
    %v287 = vpop.f32.mrf.mxu0
    %v288 = vadd.f32 0.0, %v287
    %289 = vmatmul.bf16.gmra.mxu0 %v204
    %v290 = vpop.f32.mrf.mxu0
    %v291 = vadd.f32 0.0, %v290
    %v292 = vpop.f32.mrf.mxu0
    %v293 = vadd.f32 0.0, %v292
    %294 = vdwg.mxu0
    %v295 = vpack.c.bf16 %v216, %v216
    %v296 = vpack.c.bf16 %v218, %v218
    %v297 = vpack.c.bf16 %v221, %v221
    %v298 = vpack.c.bf16 %v223, %v223
    %v299 = vpack.c.bf16 %v226, %v226
    %v300 = vpack.c.bf16 %v228, %v228
    %v301 = vpack.c.bf16 %v231, %v231
    %v302 = vpack.c.bf16 %v233, %v233
    %v303 = vpack.c.bf16 %v236, %v236
    %v304 = vpack.c.bf16 %v238, %v238
    %v305 = vpack.c.bf16 %v241, %v241
    %v306 = vpack.c.bf16 %v243, %v243
    %v307 = vpack.c.bf16 %v246, %v246
    %v308 = vpack.c.bf16 %v248, %v248
    %v309 = vpack.c.bf16 %v251, %v251
    %v310 = vpack.c.bf16 %v253, %v253
    %v311 = vpack.c.bf16 %v256, %v256
    %v312 = vpack.c.bf16 %v258, %v258
    %v313 = vpack.c.bf16 %v261, %v261
    %v314 = vpack.c.bf16 %v263, %v263
    %v315 = vpack.c.bf16 %v266, %v266
    %v316 = vpack.c.bf16 %v268, %v268
    %v317 = vpack.c.bf16 %v271, %v271
    %v318 = vpack.c.bf16 %v273, %v273
    %v319 = vpack.c.bf16 %v276, %v276
    %v320 = vpack.c.bf16 %v278, %v278
    %v321 = vpack.c.bf16 %v281, %v281
    %v322 = vpack.c.bf16 %v283, %v283
    %v323 = vpack.c.bf16 %v286, %v286
    %v324 = vpack.c.bf16 %v288, %v288
    %v325 = vpack.c.bf16 %v291, %v291
    %v326 = vpack.c.bf16 %v293, %v293
    %327 = vst [vmem:[#allocation2] sm:$0xf] %v295
    %328 = vst [vmem:[#allocation2 + $0x4] sm:$0xf] %v296
    %329 = vst [vmem:[#allocation2 + $0x8] sm:$0xf] %v297
    %330 = vst [vmem:[#allocation2 + $0xc] sm:$0xf] %v298
    %331 = vst [vmem:[#allocation2 + $0x10] sm:$0xf] %v299
    %332 = vst [vmem:[#allocation2 + $0x14] sm:$0xf] %v300
    %333 = vst [vmem:[#allocation2 + $0x18] sm:$0xf] %v301
    %334 = vst [vmem:[#allocation2 + $0x1c] sm:$0xf] %v302
    %335 = vst [vmem:[#allocation2 + $0x20] sm:$0xf] %v303
    %336 = vst [vmem:[#allocation2 + $0x24] sm:$0xf] %v304
    %337 = vst [vmem:[#allocation2 + $0x28] sm:$0xf] %v305
    %338 = vst [vmem:[#allocation2 + $0x2c] sm:$0xf] %v306
    %339 = vst [vmem:[#allocation2 + $0x30] sm:$0xf] %v307
    %340 = vst [vmem:[#allocation2 + $0x34] sm:$0xf] %v308
    %341 = vst [vmem:[#allocation2 + $0x38] sm:$0xf] %v309
    %342 = vst [vmem:[#allocation2 + $0x3c] sm:$0xf] %v310
    %343 = vst [vmem:[#allocation2 + $0x40] sm:$0xf] %v311
    %344 = vst [vmem:[#allocation2 + $0x44] sm:$0xf] %v312
    %345 = vst [vmem:[#allocation2 + $0x48] sm:$0xf] %v313
    %346 = vst [vmem:[#allocation2 + $0x4c] sm:$0xf] %v314
    %347 = vst [vmem:[#allocation2 + $0x50] sm:$0xf] %v315
    %348 = vst [vmem:[#allocation2 + $0x54] sm:$0xf] %v316
    %349 = vst [vmem:[#allocation2 + $0x58] sm:$0xf] %v317
    %350 = vst [vmem:[#allocation2 + $0x5c] sm:$0xf] %v318
    %351 = vst [vmem:[#allocation2 + $0x60] sm:$0xf] %v319
    %352 = vst [vmem:[#allocation2 + $0x64] sm:$0xf] %v320
    %353 = vst [vmem:[#allocation2 + $0x68] sm:$0xf] %v321
    %354 = vst [vmem:[#allocation2 + $0x6c] sm:$0xf] %v322
    %355 = vst [vmem:[#allocation2 + $0x70] sm:$0xf] %v323
    %356 = vst [vmem:[#allocation2 + $0x74] sm:$0xf] %v324
    %357 = vst [vmem:[#allocation2 + $0x78] sm:$0xf] %v325
    %358 = vst [vmem:[#allocation2 + $0x7c] sm:$0xf] %v326
    // Predicated region
    $region10: #{tpu_custom_call.1} parent=1 // pred_check
      _
    $region11: #{tpu_custom_call.1} parent=1 // pred_check_branch
      %360 = sbr.rel (0) target = $region13
    $region12: #{tpu_custom_call.1} parent=1 // pred_region
      %362 = vsyncadd [#allocation3], 0
      %s363 = sshll.u32 [#allocation2], 4
      %s364 = int_to_ptr.vmem [resolvable:$true] %s363
      %s365 = sshll.u32 %s2, 4
      %s366 = int_to_ptr.hbm [resolvable:$true] %s365
      %371 = dma.vmem_to_hbm [thread:$0]  %s364, 2048, %s366, [#allocation3], 64, 64, 4
    $region13: #{tpu_custom_call.1} parent=1 // pred_fallthru
      _
    // Predicated region
    $region14: #{tpu_custom_call.1} parent=1 // pred_check
      _
    $region15: #{tpu_custom_call.1} parent=1 // pred_check_branch
      %373 = sbr.rel (0) target = $region17
    $region16: #{tpu_custom_call.1} parent=1 // pred_region
      %375 = dma.done [#allocation3], 2048
    $region17: #{tpu_custom_call.1} parent=1 // pred_fallthru
      _
    %376 = vsyncpa [#allocation3], 1

</llo_original>
